<compile_context>
chip_gen: v7x
topology: tpu7x:2x2x1
jax: 0.10.0
libtpu: 0.0.40
codegen_flags: <defaults>
</compile_context>

<pallas_src>
import math

import jax
import jax.numpy as jnp
from jax.experimental import pallas as pl
from jax.experimental.pallas import tpu as pltpu

# Rows packed per lane-row.  With n_inputs=8 / n_outputs=4 this gives exactly
# 32*8 = 256 input lanes and 32*4 = 128 output lanes (perfectly lane dense).
P = 32


def _round_up(n, m):
    return ((n + m - 1) // m) * m


# ----------------------------- Pallas kernel ------------------------------- #
def val_block_kernel(x_ref, w_ref, b_ref, a_ref, out_ref):
    # (tile, 256) @ (256, 128) on the MXU with f32 accumulation.
    h = jnp.dot(x_ref[...], w_ref[...], preferred_element_type=jnp.float32)
    h = h + b_ref[...]                         # (1, 128) fused bias, broadcast
    alpha = a_ref[0]                           # PReLU slope: scalar from SMEM
    out_ref[...] = jnp.where(h >= 0.0, h, alpha * h).astype(out_ref.dtype)


# ------------------------------- wrapper ------------------------------------ #
def val_block_forward(x, p):
    """x: (..., C_in) float32.  Returns (..., C_out) = PReLU(linear(linear_h(x)))."""
    lead_shape = x.shape[:-1]
    c_in = x.shape[-1]
    c_out = p["lin_w"].shape[0]
    rows = math.prod(lead_shape)
    x2 = x.reshape(rows, c_in).astype(jnp.float32)

    # Algebraic fusion of linear_h followed by linear (no nonlinearity between).
    w_fused = p["lin_h_w"].T @ p["lin_w"].T                    # (C_in, C_out)
    b_fused = p["lin_h_b"] @ p["lin_w"].T + p["lin_b"]         # (C_out,)

    lanes_in = P * c_in      # 256 for this module
    lanes_out = P * c_out    # 128 for this module
    pack_rows = pl.cdiv(rows, P)

    # Tile choice: large packed tiles (amortize per-step overhead), but keep
    # >= 4 grid steps when there is real work so v7x's 2 TCs both get shards.
    if pack_rows <= 64:
        tile = pack_rows                                   # single full-extent block
    else:
        tile = min(4096, _round_up(pl.cdiv(pack_rows, 4), 8))
    pack_rows_p = _round_up(pack_rows, tile)
    rows_p = pack_rows_p * P

    if rows_p != rows:                                     # only pad if misaligned
        x2 = jnp.pad(x2, ((0, rows_p - rows), (0, 0)))
    x_packed = x2.reshape(pack_rows_p, lanes_in)           # free row-major reshape

    # Block-diagonal fused weight: out[i, r*c_out+o] = sum_c x[i, r*c_in+c]*Wf[c,o]
    w_bd = jnp.kron(jnp.eye(P, dtype=jnp.float32),
                    w_fused.astype(jnp.float32))           # (P*c_in, P*c_out)
    b_tiled = jnp.tile(b_fused.astype(jnp.float32), P).reshape(1, lanes_out)
    alpha = jnp.asarray(p["prelu_a"], jnp.float32).reshape(1)   # SMEM scalar

    grid = (pack_rows_p // tile,)
    out_packed = pl.pallas_call(
        val_block_kernel,
        out_shape=jax.ShapeDtypeStruct((pack_rows_p, lanes_out), jnp.float32),
        grid=grid,
        in_specs=[
            pl.BlockSpec((tile, lanes_in), lambda i: (i, 0)),       # packed activations
            pl.BlockSpec((lanes_in, lanes_out), lambda i: (0, 0)),  # block-diag weight (resident)
            pl.BlockSpec((1, lanes_out), lambda i: (0, 0)),         # tiled fused bias
            pl.BlockSpec(memory_space=pltpu.MemorySpace.SMEM),      # PReLU alpha (scalar)
        ],
        out_specs=pl.BlockSpec((tile, lanes_out), lambda i: (i, 0)),
        compiler_params=pltpu.CompilerParams(
            dimension_semantics=("parallel",),
            vmem_limit_bytes=32 * 1024 * 1024,
        ),
        cost_estimate=pl.CostEstimate(
            flops=2 * rows * c_in * c_out,
            transcendentals=0,
            bytes_accessed=rows * (c_in + c_out) * 4 + lanes_in * lanes_out * 4,
        ),
    )(x_packed, w_bd, b_tiled, alpha)

    out = out_packed.reshape(rows_p, c_out)                 # free reshape back
    if rows_p != rows:
        out = out[:rows]
    return out.reshape(lead_shape + (c_out,))


# ---------------------------- pure-JAX reference ---------------------------- #
def reference_forward(x, p):
    h = x @ p["lin_h_w"].T + p["lin_h_b"]                  # linear_h
    y = h @ p["lin_w"].T + p["lin_b"]                      # linear
    return jnp.where(y >= 0.0, y, p["prelu_a"] * y)        # PReLU (single shared param)


if __name__ == "__main__":
    # ValBlock(target, n_inputs=8, n_outputs=4); x is (batch, seq, n_inputs).
    B, L, C_IN, C_OUT = 2, 16, 8, 4

    key = jax.random.PRNGKey(0)
    kx, k1, k2, k3, k4 = jax.random.split(key, 5)
    x = jax.random.normal(kx, (B, L, C_IN), jnp.float32)

    params = {
        "lin_h_w": 0.1 * jax.random.normal(k1, (C_IN, C_IN), jnp.float32),
        "lin_h_b": 0.05 * jax.random.normal(k2, (C_IN,), jnp.float32),
        # init_weights(): linear.weight.data.normal_(0, 0.1)
        "lin_w": 0.1 * jax.random.normal(k3, (C_OUT, C_IN), jnp.float32),
        "lin_b": 0.05 * jax.random.normal(k4, (C_OUT,), jnp.float32),
        "prelu_a": jnp.float32(0.25),   # nn.PReLU() default: one shared parameter
    }

    out = val_block_forward(x, params)
    out = jax.block_until_ready(out)

    ref = reference_forward(x, params)
    assert out.shape == (B, L, C_OUT)
    assert jnp.allclose(out, ref, atol=1e-5, rtol=1e-5), "Pallas kernel mismatch vs reference"
    print("KERNEL_OK")
</pallas_src>

<mosaic_0001>
module attributes {stable_mosaic.version = 11 : i64} {
  func.func @val_block_kernel(%arg0: i32, %arg1: memref<1x256xf32, #tpu.memory_space<vmem>>, %arg2: memref<256x128xf32, #tpu.memory_space<vmem>>, %arg3: memref<1x128xf32, #tpu.memory_space<vmem>>, %arg4: memref<1xf32, #tpu.memory_space<smem>>, %arg5: memref<1x128xf32, #tpu.memory_space<vmem>>) attributes {dimension_semantics = [#tpu.dimension_semantics<parallel>], iteration_bounds = array<i64: 1>, scalar_prefetch = 0 : i64, scratch_operands = 0 : i64, tpu.core_type = #tpu.core_type<tc>, window_params = [{transform_indices = @transform_0, window_bounds = array<i64: 1, 256>}, {pipeline_mode = #tpu.pipeline_mode<synchronous>, transform_indices = @transform_1, window_bounds = array<i64: 256, 128>}, {pipeline_mode = #tpu.pipeline_mode<synchronous>, transform_indices = @transform_2, window_bounds = array<i64: 1, 128>}, {transform_indices = @transform_3, window_bounds = array<i64: 1>}, {transform_indices = @transform_4, window_bounds = array<i64: 1, 128>}]} {
    %c0 = arith.constant 0 : index
    %c0_0 = arith.constant 0 : index
    %0 = vector.load %arg1[%c0, %c0_0] : memref<1x256xf32, #tpu.memory_space<vmem>>, vector<1x256xf32>
    %c0_1 = arith.constant 0 : index
    %c0_2 = arith.constant 0 : index
    %1 = vector.load %arg2[%c0_1, %c0_2] : memref<256x128xf32, #tpu.memory_space<vmem>>, vector<256x128xf32>
    %cst = arith.constant dense<0.000000e+00> : vector<1x128xf32>
    %2 = tpu.matmul %0, %1, %cst {dimension_numbers = #tpu.dot_dimension_numbers<[1], [0], [0], [1], [0, 0, 1, 1], [], []>} : vector<1x256xf32>, vector<256x128xf32>, vector<1x128xf32> -> vector<1x128xf32>
    %c0_3 = arith.constant 0 : index
    %c0_4 = arith.constant 0 : index
    %3 = vector.load %arg3[%c0_3, %c0_4] : memref<1x128xf32, #tpu.memory_space<vmem>>, vector<1x128xf32>
    %4 = arith.addf %2, %3 : vector<1x128xf32>
    %c0_5 = arith.constant 0 : index
    %5 = memref.load %arg4[%c0_5] : memref<1xf32, #tpu.memory_space<smem>>
    %cst_6 = arith.constant 0.000000e+00 : f32
    %6 = vector.broadcast %cst_6 : f32 to vector<1x128xf32>
    %7 = arith.cmpf oge, %4, %6 : vector<1x128xf32>
    %8 = vector.broadcast %5 : f32 to vector<1x128xf32>
    %9 = arith.mulf %8, %4 : vector<1x128xf32>
    %10 = arith.select %7, %4, %9 : vector<1x128xi1>, vector<1x128xf32>
    %c0_7 = arith.constant 0 : index
    %c0_8 = arith.constant 0 : index
    %11 = vector.load %arg5[%c0_7, %c0_8] : memref<1x128xf32, #tpu.memory_space<vmem>>, vector<1x128xf32>
    tpu.vector_store %arg5[%c0_7, %c0_8], %10 {strides = array<i32>} : memref<1x128xf32, #tpu.memory_space<vmem>>, vector<1x128xf32>,
    return
  }
  func.func @transform_0(%arg0: i32) -> (i32, i32) {
    %c0_i32 = arith.constant 0 : i32
    %c0_i32_0 = arith.constant 0 : i32
    return %arg0, %c0_i32 : i32, i32
  }
  func.func @transform_1(%arg0: i32) -> (i32, i32) {
    %c0_i32 = arith.constant 0 : i32
    %c0_i32_0 = arith.constant 0 : i32
    %c0_i32_1 = arith.constant 0 : i32
    return %c0_i32, %c0_i32_0 : i32, i32
  }
  func.func @transform_2(%arg0: i32) -> (i32, i32) {
    %c0_i32 = arith.constant 0 : i32
    %c0_i32_0 = arith.constant 0 : i32
    %c0_i32_1 = arith.constant 0 : i32
    return %c0_i32, %c0_i32_0 : i32, i32
  }
  func.func @transform_3(%arg0: i32) -> i32 {
    %c0_i32 = arith.constant 0 : i32
    %c0_i32_0 = arith.constant 0 : i32
    return %c0_i32 : i32
  }
  func.func @transform_4(%arg0: i32) -> (i32, i32) {
    %c0_i32 = arith.constant 0 : i32
    %c0_i32_0 = arith.constant 0 : i32
    return %arg0, %c0_i32 : i32, i32
  }
}

</mosaic_0001>

<llo_original>
// kernel: tpu_custom_call.1
$region0: #{tpu_custom_call.1}
  #allocation0 [shape = 'u32[]', space=smem, size = 0x4, offset = 0x4, fixed_abs, tag = 'smem constant byte address 0x4 - core index']
  #allocation1 [shape = 'u32[144,128]{1,0:T(1,128)}', space=vmem, size = 0x12000, scoped, tag = 'internal scratch']
  #allocation2 [shape = 'f32[1]{0:T(128)S(6)}', space=smem, size = 0x200, scoped, tag = 'scoped memory for tpu_custom_call.1']
  %s0 = inlined_call_operand.vmem [shape: f32[1,256], index: 0, kind: input, shape index: {}]
  %s1 = inlined_call_operand.hbm [shape: f32[256,128], index: 1, kind: input, shape index: {}]
  %s2 = inlined_call_operand.vmem [shape: f32[1,128], index: 2, kind: input, shape index: {}]
  %s3 = inlined_call_operand.<no memory space> [shape: f32[1], index: 3, kind: input, shape index: {}]
  %s4 = inlined_call_operand.hbm [shape: f32[1,128], index: 4, kind: output, shape index: {}]
  %s5 = sld [smem:[#allocation0]]
  $region30: #{tpu_custom_call.1} parent=0
    _
  %s7 = ssub.s32 1, %s5
  %s8 = scalar_select 0, %s7, %s5
  %9 = sst [smem:[#allocation2]] %s3
  $region1: #{tpu_custom_call.1} parent=0
    #allocation3 [shape = 'u8[131072]{0}', space=vmem, size = 0x20000, scoped, tag = 'input window, operand 1, single buffered']
    #allocation4 [shape = 's32[1]{0}', space=sflag, size = 0x4, scoped, tag = 'scoped memory for tpu_custom_call.1']
    #allocation5 [shape = 's32[1]{0}', space=sflag, size = 0x4, scoped, tag = 'scoped memory for tpu_custom_call.1']
    #allocation6 [shape = 'u8[512]{0}', space=vmem, size = 0x400, scoped, tag = 'output window, operand 0, single buffered']
    %10 = vsyncpa [#allocation4], 0
    %11 = vsyncpa [#allocation5], 0
    // Predicated region
    $region2: #{tpu_custom_call.1} parent=1 // pred_check
      _
    $region3: #{tpu_custom_call.1} parent=1 // pred_check_branch
      %13 = sbr.rel (0) target = $region5
    $region4: #{tpu_custom_call.1} parent=1 // pred_region
      _
    $region5: #{tpu_custom_call.1} parent=1 // pred_fallthru
      _
    // Predicated region
    $region6: #{tpu_custom_call.1} parent=1 // pred_check
      _
    $region7: #{tpu_custom_call.1} parent=1 // pred_check_branch
      %15 = sbr.rel (0) target = $region9
    $region8: #{tpu_custom_call.1} parent=1 // pred_region
      %s17 = ssub.s32 4096, 4096
      %18 = vsyncadd [#allocation4], %s17
      %s19 = sshll.u32 [#allocation3], 4
      %s20 = int_to_ptr.vmem [resolvable:$true] %s19
      %25 = dma.hbm_to_vmem [thread:$0]  %s1, 4096, %s20, [#allocation4], 128, 128, 8
    $region9: #{tpu_custom_call.1} parent=1 // pred_fallthru
      _
    // Predicated region
    $region10: #{tpu_custom_call.1} parent=1 // pred_check
      _
    $region11: #{tpu_custom_call.1} parent=1 // pred_check_branch
      %27 = sbr.rel (0) target = $region13
    $region12: #{tpu_custom_call.1} parent=1 // pred_region
      _
    $region13: #{tpu_custom_call.1} parent=1 // pred_fallthru
      _
    // Predicated region
    $region14: #{tpu_custom_call.1} parent=1 // pred_check
      _
    $region15: #{tpu_custom_call.1} parent=1 // pred_check_branch
      %29 = sbr.rel (0) target = $region17
    $region16: #{tpu_custom_call.1} parent=1 // pred_region
      _
    $region17: #{tpu_custom_call.1} parent=1 // pred_fallthru
      _
    // Predicated region
    $region18: #{tpu_custom_call.1} parent=1 // pred_check
      _
    $region19: #{tpu_custom_call.1} parent=1 // pred_check_branch
      %31 = sbr.rel (0) target = $region21
    $region20: #{tpu_custom_call.1} parent=1 // pred_region
      %32 = dma.done [#allocation4], 4096
    $region21: #{tpu_custom_call.1} parent=1 // pred_fallthru
      _
    %v33 = vld [vmem:[%s0] sm:$0x3]
    %v34 = vld [vmem:[#allocation3] sm:$0xff]
    %v35 = vld [vmem:[#allocation3 + $0x8] sm:$0xff]
    %v36 = vld [vmem:[#allocation3 + $0x10] sm:$0xff]
    %v37 = vld [vmem:[#allocation3 + $0x18] sm:$0xff]
    %v38 = vld [vmem:[#allocation3 + $0x20] sm:$0xff]
    %v39 = vld [vmem:[#allocation3 + $0x28] sm:$0xff]
    %v40 = vld [vmem:[#allocation3 + $0x30] sm:$0xff]
    %v41 = vld [vmem:[#allocation3 + $0x38] sm:$0xff]
    %v42 = vld [vmem:[#allocation3 + $0x40] sm:$0xff]
    %v43 = vld [vmem:[#allocation3 + $0x48] sm:$0xff]
    %v44 = vld [vmem:[#allocation3 + $0x50] sm:$0xff]
    %v45 = vld [vmem:[#allocation3 + $0x58] sm:$0xff]
    %v46 = vld [vmem:[#allocation3 + $0x60] sm:$0xff]
    %v47 = vld [vmem:[#allocation3 + $0x68] sm:$0xff]
    %v48 = vld [vmem:[#allocation3 + $0x70] sm:$0xff]
    %v49 = vld [vmem:[#allocation3 + $0x78] sm:$0xff]
    %v50 = vld [vmem:[#allocation3 + $0x80] sm:$0xff]
    %v51 = vld [vmem:[#allocation3 + $0x88] sm:$0xff]
    %v52 = vld [vmem:[#allocation3 + $0x90] sm:$0xff]
    %v53 = vld [vmem:[#allocation3 + $0x98] sm:$0xff]
    %v54 = vld [vmem:[#allocation3 + $0xa0] sm:$0xff]
    %v55 = vld [vmem:[#allocation3 + $0xa8] sm:$0xff]
    %v56 = vld [vmem:[#allocation3 + $0xb0] sm:$0xff]
    %v57 = vld [vmem:[#allocation3 + $0xb8] sm:$0xff]
    %v58 = vld [vmem:[#allocation3 + $0xc0] sm:$0xff]
    %v59 = vld [vmem:[#allocation3 + $0xc8] sm:$0xff]
    %v60 = vld [vmem:[#allocation3 + $0xd0] sm:$0xff]
    %v61 = vld [vmem:[#allocation3 + $0xd8] sm:$0xff]
    %v62 = vld [vmem:[#allocation3 + $0xe0] sm:$0xff]
    %v63 = vld [vmem:[#allocation3 + $0xe8] sm:$0xff]
    %v64 = vld [vmem:[#allocation3 + $0xf0] sm:$0xff]
    %v65 = vld [vmem:[#allocation3 + $0xf8] sm:$0xff]
    %v66 = vld [vmem:[%s2] sm:$0x1]
    %v68 = vlaneseq
    %v69 = vshrl.u32 %v68, 7
    %v70 = vsub.s32 0, %v69
    %v71 = vrot.slane %v33, %v70
    %v72 = vlaneseq
    %v73 = vshrl.u32 %v72, 7
    %v74 = vsub.s32 1, %v73
    %v75 = vrot.slane %v33, %v74
    %78 = vmatprep.subr.mxu0 0.0
    %79 = vmatpush1.msra.mxu0 %v34
    %80 = vmatprep.subr.mxu0 0.0
    %81 = vmatpush1.msra.mxu0 %v35
    %82 = vmatprep.subr.mxu0 0.0
    %83 = vmatpush1.msra.mxu0 %v36
    %84 = vmatprep.subr.mxu0 0.0
    %85 = vmatpush1.msra.mxu0 %v37
    %86 = vmatprep.subr.mxu0 0.0
    %87 = vmatpush1.msra.mxu0 %v38
    %88 = vmatprep.subr.mxu0 0.0
    %89 = vmatpush1.msra.mxu0 %v39
    %90 = vmatprep.subr.mxu0 0.0
    %91 = vmatpush1.msra.mxu0 %v40
    %92 = vmatprep.subr.mxu0 0.0
    %93 = vmatpush1.msra.mxu0 %v41
    %94 = vmatprep.subr.mxu0 0.0
    %95 = vmatpush1.msra.mxu0 %v42
    %96 = vmatprep.subr.mxu0 0.0
    %97 = vmatpush1.msra.mxu0 %v43
    %98 = vmatprep.subr.mxu0 0.0
    %99 = vmatpush1.msra.mxu0 %v44
    %100 = vmatprep.subr.mxu0 0.0
    %101 = vmatpush1.msra.mxu0 %v45
    %102 = vmatprep.subr.mxu0 0.0
    %103 = vmatpush1.msra.mxu0 %v46
    %104 = vmatprep.subr.mxu0 0.0
    %105 = vmatpush1.msra.mxu0 %v47
    %106 = vmatprep.subr.mxu0 0.0
    %107 = vmatpush1.msra.mxu0 %v48
    %108 = vmatprep.subr.mxu0 0.0
    %109 = vmatpush1.msra.mxu0 %v49
    %110 = vmatprep.subr.mxu0 0.0
    %111 = vmatpush1.msra.mxu0 %v50
    %112 = vmatprep.subr.mxu0 0.0
    %113 = vmatpush1.msra.mxu0 %v51
    %114 = vmatprep.subr.mxu0 0.0
    %115 = vmatpush1.msra.mxu0 %v52
    %116 = vmatprep.subr.mxu0 0.0
    %117 = vmatpush1.msra.mxu0 %v53
    %118 = vmatprep.subr.mxu0 0.0
    %119 = vmatpush1.msra.mxu0 %v54
    %120 = vmatprep.subr.mxu0 0.0
    %121 = vmatpush1.msra.mxu0 %v55
    %122 = vmatprep.subr.mxu0 0.0
    %123 = vmatpush1.msra.mxu0 %v56
    %124 = vmatprep.subr.mxu0 0.0
    %125 = vmatpush1.msra.mxu0 %v57
    %126 = vmatprep.subr.mxu0 0.0
    %127 = vmatpush1.msra.mxu0 %v58
    %128 = vmatprep.subr.mxu0 0.0
    %129 = vmatpush1.msra.mxu0 %v59
    %130 = vmatprep.subr.mxu0 0.0
    %131 = vmatpush1.msra.mxu0 %v60
    %132 = vmatprep.subr.mxu0 0.0
    %133 = vmatpush1.msra.mxu0 %v61
    %134 = vmatprep.subr.mxu0 0.0
    %135 = vmatpush1.msra.mxu0 %v62
    %136 = vmatprep.subr.mxu0 0.0
    %137 = vmatpush1.msra.mxu0 %v63
    %138 = vmatprep.subr.mxu0 0.0
    %139 = vmatpush1.msra.mxu0 %v64
    %140 = vmatprep.subr.mxu0 0.0
    %141 = vmatpush1.msra.mxu0 %v65
    %142 = vmatprep.mubr.f32.mxu0 %v75
    %143 = vmatmul.mubr.f32.gmra.mrb[0].mxu0 %v71
    %v144 = vpop.f32.mrb[0].mxu0
    %v145 = vadd.f32 %v66, %v144
    %v146 = vpop.f32.mrb[0].mxu0
    %147 = vdwg.mxu0
    %s148 = sld [smem:[#allocation2]]
    %vm149 = vcmp.ge.f32.partialorder %v145, 0.0
    %v150 = vstv %s148
    %v151 = vmul.f32 %v150, %v145
    %v152 = vsel %vm149, %v145, %v151
    %153 = vst [vmem:[#allocation6] sm:$0x1] %v152
    // Predicated region
    $region22: #{tpu_custom_call.1} parent=1 // pred_check
      _
    $region23: #{tpu_custom_call.1} parent=1 // pred_check_branch
      %155 = sbr.rel (0) target = $region25
    $region24: #{tpu_custom_call.1} parent=1 // pred_region
      %s157 = ssub.s32 16, 16
      %158 = vsyncadd [#allocation5], %s157
      %s160 = sshll.u32 [#allocation6], 4
      %s161 = int_to_ptr.vmem [resolvable:$true] %s160
      %163 = dma.vmem_to_hbm [thread:$0]  %s161, 16, %s4, [#allocation5]
    $region25: #{tpu_custom_call.1} parent=1 // pred_fallthru
      _
    // Predicated region
    $region26: #{tpu_custom_call.1} parent=1 // pred_check
      _
    $region27: #{tpu_custom_call.1} parent=1 // pred_check_branch
      %165 = sbr.rel (0) target = $region29
    $region28: #{tpu_custom_call.1} parent=1 // pred_region
      %166 = dma.done [#allocation5], 16
    $region29: #{tpu_custom_call.1} parent=1 // pred_fallthru
      _
    %167 = vsyncpa [#allocation4], 1
    %168 = vsyncpa [#allocation5], 1

</llo_original>
